<compile_context>
chip_gen: v7x
topology: tpu7x:2x2x1
jax: 0.10.0
libtpu: 0.0.40
codegen_flags: <defaults>
</compile_context>

<pallas_src>
import functools

import jax
import jax.numpy as jnp
from jax.experimental import pallas as pl
from jax.experimental.pallas import tpu as pltpu


def _chunk_bounds(n_rows: int, n_chunks: int):
    """Static (start, size) chunks along the leading axis."""
    if n_rows <= 0:
        return ((0, n_rows),)
    n_chunks = max(1, min(n_chunks, n_rows))
    base, rem = divmod(n_rows, n_chunks)
    bounds, start = [], 0
    for i in range(n_chunks):
        size = base + (1 if i < rem else 0)
        if size > 0:
            bounds.append((start, size))
            start += size
    return tuple(bounds)


def _hbm_chunked_copy_kernel(bounds, src_ref, dst_ref, sems):
    # Issue every chunk DMA before waiting on any -> several transfers
    # outstanding, pure HBM-bandwidth-bound on v5e/v6e/v7x.
    copies = []
    for i, (start, size) in enumerate(bounds):
        cp = pltpu.make_async_copy(
            src_ref.at[pl.ds(start, size)],
            dst_ref.at[pl.ds(start, size)],
            sems.at[i],
        )
        cp.start()
        copies.append(cp)
    for cp in copies:
        cp.wait()


@functools.partial(jax.jit, static_argnames=("num_chunks",))
def materialize_copy(x: jax.Array, *, num_chunks: int = 4) -> jax.Array:
    """Materialize `x` into a distinct buffer via chunked HBM->HBM DMA."""
    if x.ndim == 0:
        # TODO(synk): 0-d scalars have no DMA-able leading axis; no kernel.
        return x + jnp.zeros_like(x)
    bounds = _chunk_bounds(x.shape[0], num_chunks)
    return pl.pallas_call(
        functools.partial(_hbm_chunked_copy_kernel, bounds),
        out_shape=jax.ShapeDtypeStruct(x.shape, x.dtype),
        in_specs=[pl.BlockSpec(memory_space=pl.ANY)],
        out_specs=pl.BlockSpec(memory_space=pl.ANY),
        scratch_shapes=[pltpu.SemaphoreType.DMA((len(bounds),))],
    )(x)


class DictKeysModule:
    """JAX/Pallas port of the PyTorch DictKeysModule.

    Walks `keys` through a nested dict of features and returns
    {'preds': features, 'target': targets}.

    Default path (materialize=False): pure pass-through — no kernel, no copy,
    matching PyTorch semantics exactly (the returned tensor IS the dict entry).
    Optional path (materialize=True): returns `preds` in a distinct buffer via
    a jitted, chunked HBM->HBM DMA Pallas kernel.
    """

    def __init__(self, keys, materialize: bool = False):
        self.keys = list(keys)
        self.materialize = materialize

    def __call__(self, features_dict, targets):
        # Structural glue: nested dict key extraction (no tensor math).
        for k in self.keys:
            features_dict = features_dict[k]
        preds = features_dict
        if self.materialize:
            preds = materialize_copy(preds)
        return {"preds": preds, "target": targets}


if __name__ == "__main__":
    key = jax.random.PRNGKey(0)
    k_feat, k_tgt = jax.random.split(key)

    # Small shapes consistent with a kNN-eval feature extractor:
    # batch=8 samples, hidden=32 feature dim, 1-D int32 class labels.
    B, D = 8, 32
    features = jax.random.normal(k_feat, (B, D), dtype=jnp.float32)
    targets = jax.random.randint(k_tgt, (B,), 0, 10, dtype=jnp.int32)

    # Nested feature dict, as produced upstream in the dinov2 eval pipeline.
    features_dict = {"backbone": {"cls_token": features}}

    # Default (recommended) path: zero-copy pass-through, no kernel at all.
    module = DictKeysModule(keys=["backbone", "cls_token"])
    out = module(features_dict, targets)
    jax.block_until_ready(out["preds"])
    jax.block_until_ready(out["target"])
    assert out["preds"].shape == (B, D) and out["preds"].dtype == jnp.float32
    assert out["target"].shape == (B,) and out["target"].dtype == jnp.int32
    assert bool(jnp.all(out["preds"] == features))
    assert bool(jnp.all(out["target"] == targets))

    # Optional materialization path: run the Pallas DMA kernel once.
    module_mat = DictKeysModule(keys=["backbone", "cls_token"], materialize=True)
    out_mat = module_mat(features_dict, targets)
    jax.block_until_ready(out_mat["preds"])
    jax.block_until_ready(out_mat["target"])
    assert out_mat["preds"].shape == (B, D) and out_mat["preds"].dtype == jnp.float32
    assert bool(jnp.all(out_mat["preds"] == features))
    assert bool(jnp.all(out_mat["target"] == targets))

    print("KERNEL_OK")
</pallas_src>

<mosaic_0001>
module attributes {stable_mosaic.version = 11 : i64} {
  func.func @_hbm_chunked_copy_kernel(%arg0: memref<8x32xf32, #tpu.memory_space<any>>, %arg1: memref<8x32xf32, #tpu.memory_space<any>>, %arg2: memref<4x!tpu.dma_semaphore, #tpu.memory_space<semaphore_mem>>) attributes {dimension_semantics = [], scalar_prefetch = 0 : i64, scratch_operands = 1 : i64, tpu.core_type = #tpu.core_type<tc>} {
    %c0_i32 = arith.constant 0 : i32
    %c0_i32_0 = arith.constant 0 : i32
    %c0_i32_1 = arith.constant 0 : i32
    %0 = tpu.memref_slice %arg0[%c0_i32_0, %c0_i32_1] : memref<8x32xf32, #tpu.memory_space<any>> -> memref<2x32xf32, #tpu.memory_space<any>>
    %c0_i32_2 = arith.constant 0 : i32
    %c0_i32_3 = arith.constant 0 : i32
    %1 = tpu.memref_slice %arg1[%c0_i32_2, %c0_i32_3] : memref<8x32xf32, #tpu.memory_space<any>> -> memref<2x32xf32, #tpu.memory_space<any>>
    %2 = tpu.memref_slice %arg2[%c0_i32] : memref<4x!tpu.dma_semaphore, #tpu.memory_space<semaphore_mem>> -> memref<1x!tpu.dma_semaphore, #tpu.memory_space<semaphore_mem>>
    %3 = tpu.memref_squeeze %2 : memref<1x!tpu.dma_semaphore, #tpu.memory_space<semaphore_mem>> -> memref<!tpu.dma_semaphore, #tpu.memory_space<semaphore_mem>>
    tpu.enqueue_dma source(%0 : memref<2x32xf32, #tpu.memory_space<any>>) target(%1 : memref<2x32xf32, #tpu.memory_space<any>>) target_semaphore(%3 : memref<!tpu.dma_semaphore, #tpu.memory_space<semaphore_mem>>)
    %c1_i32 = arith.constant 1 : i32
    %c2_i32 = arith.constant 2 : i32
    %c0_i32_4 = arith.constant 0 : i32
    %4 = tpu.memref_slice %arg0[%c2_i32, %c0_i32_4] : memref<8x32xf32, #tpu.memory_space<any>> -> memref<2x32xf32, #tpu.memory_space<any>>
    %c2_i32_5 = arith.constant 2 : i32
    %c0_i32_6 = arith.constant 0 : i32
    %5 = tpu.memref_slice %arg1[%c2_i32_5, %c0_i32_6] : memref<8x32xf32, #tpu.memory_space<any>> -> memref<2x32xf32, #tpu.memory_space<any>>
    %6 = tpu.memref_slice %arg2[%c1_i32] : memref<4x!tpu.dma_semaphore, #tpu.memory_space<semaphore_mem>> -> memref<1x!tpu.dma_semaphore, #tpu.memory_space<semaphore_mem>>
    %7 = tpu.memref_squeeze %6 : memref<1x!tpu.dma_semaphore, #tpu.memory_space<semaphore_mem>> -> memref<!tpu.dma_semaphore, #tpu.memory_space<semaphore_mem>>
    tpu.enqueue_dma source(%4 : memref<2x32xf32, #tpu.memory_space<any>>) target(%5 : memref<2x32xf32, #tpu.memory_space<any>>) target_semaphore(%7 : memref<!tpu.dma_semaphore, #tpu.memory_space<semaphore_mem>>)
    %c2_i32_7 = arith.constant 2 : i32
    %c4_i32 = arith.constant 4 : i32
    %c0_i32_8 = arith.constant 0 : i32
    %8 = tpu.memref_slice %arg0[%c4_i32, %c0_i32_8] : memref<8x32xf32, #tpu.memory_space<any>> -> memref<2x32xf32, #tpu.memory_space<any>>
    %c4_i32_9 = arith.constant 4 : i32
    %c0_i32_10 = arith.constant 0 : i32
    %9 = tpu.memref_slice %arg1[%c4_i32_9, %c0_i32_10] : memref<8x32xf32, #tpu.memory_space<any>> -> memref<2x32xf32, #tpu.memory_space<any>>
    %10 = tpu.memref_slice %arg2[%c2_i32_7] : memref<4x!tpu.dma_semaphore, #tpu.memory_space<semaphore_mem>> -> memref<1x!tpu.dma_semaphore, #tpu.memory_space<semaphore_mem>>
    %11 = tpu.memref_squeeze %10 : memref<1x!tpu.dma_semaphore, #tpu.memory_space<semaphore_mem>> -> memref<!tpu.dma_semaphore, #tpu.memory_space<semaphore_mem>>
    tpu.enqueue_dma source(%8 : memref<2x32xf32, #tpu.memory_space<any>>) target(%9 : memref<2x32xf32, #tpu.memory_space<any>>) target_semaphore(%11 : memref<!tpu.dma_semaphore, #tpu.memory_space<semaphore_mem>>)
    %c3_i32 = arith.constant 3 : i32
    %c6_i32 = arith.constant 6 : i32
    %c0_i32_11 = arith.constant 0 : i32
    %12 = tpu.memref_slice %arg0[%c6_i32, %c0_i32_11] : memref<8x32xf32, #tpu.memory_space<any>> -> memref<2x32xf32, #tpu.memory_space<any>>
    %c6_i32_12 = arith.constant 6 : i32
    %c0_i32_13 = arith.constant 0 : i32
    %13 = tpu.memref_slice %arg1[%c6_i32_12, %c0_i32_13] : memref<8x32xf32, #tpu.memory_space<any>> -> memref<2x32xf32, #tpu.memory_space<any>>
    %14 = tpu.memref_slice %arg2[%c3_i32] : memref<4x!tpu.dma_semaphore, #tpu.memory_space<semaphore_mem>> -> memref<1x!tpu.dma_semaphore, #tpu.memory_space<semaphore_mem>>
    %15 = tpu.memref_squeeze %14 : memref<1x!tpu.dma_semaphore, #tpu.memory_space<semaphore_mem>> -> memref<!tpu.dma_semaphore, #tpu.memory_space<semaphore_mem>>
    tpu.enqueue_dma source(%12 : memref<2x32xf32, #tpu.memory_space<any>>) target(%13 : memref<2x32xf32, #tpu.memory_space<any>>) target_semaphore(%15 : memref<!tpu.dma_semaphore, #tpu.memory_space<semaphore_mem>>)
    %c0_i32_14 = arith.constant 0 : i32
    %c0_i32_15 = arith.constant 0 : i32
    %c0_i32_16 = arith.constant 0 : i32
    %16 = tpu.memref_slice %arg0[%c0_i32_15, %c0_i32_16] : memref<8x32xf32, #tpu.memory_space<any>> -> memref<2x32xf32, #tpu.memory_space<any>>
    %c0_i32_17 = arith.constant 0 : i32
    %c0_i32_18 = arith.constant 0 : i32
    %17 = tpu.memref_slice %arg1[%c0_i32_17, %c0_i32_18] : memref<8x32xf32, #tpu.memory_space<any>> -> memref<2x32xf32, #tpu.memory_space<any>>
    %18 = tpu.memref_slice %arg2[%c0_i32_14] : memref<4x!tpu.dma_semaphore, #tpu.memory_space<semaphore_mem>> -> memref<1x!tpu.dma_semaphore, #tpu.memory_space<semaphore_mem>>
    %19 = tpu.memref_squeeze %18 : memref<1x!tpu.dma_semaphore, #tpu.memory_space<semaphore_mem>> -> memref<!tpu.dma_semaphore, #tpu.memory_space<semaphore_mem>>
    tpu.wait_dma2 semaphore(%19 : memref<!tpu.dma_semaphore, #tpu.memory_space<semaphore_mem>>) src(%16 : memref<2x32xf32, #tpu.memory_space<any>>) dst(%17 : memref<2x32xf32, #tpu.memory_space<any>>)
    %c1_i32_19 = arith.constant 1 : i32
    %c2_i32_20 = arith.constant 2 : i32
    %c0_i32_21 = arith.constant 0 : i32
    %20 = tpu.memref_slice %arg0[%c2_i32_20, %c0_i32_21] : memref<8x32xf32, #tpu.memory_space<any>> -> memref<2x32xf32, #tpu.memory_space<any>>
    %c2_i32_22 = arith.constant 2 : i32
    %c0_i32_23 = arith.constant 0 : i32
    %21 = tpu.memref_slice %arg1[%c2_i32_22, %c0_i32_23] : memref<8x32xf32, #tpu.memory_space<any>> -> memref<2x32xf32, #tpu.memory_space<any>>
    %22 = tpu.memref_slice %arg2[%c1_i32_19] : memref<4x!tpu.dma_semaphore, #tpu.memory_space<semaphore_mem>> -> memref<1x!tpu.dma_semaphore, #tpu.memory_space<semaphore_mem>>
    %23 = tpu.memref_squeeze %22 : memref<1x!tpu.dma_semaphore, #tpu.memory_space<semaphore_mem>> -> memref<!tpu.dma_semaphore, #tpu.memory_space<semaphore_mem>>
    tpu.wait_dma2 semaphore(%23 : memref<!tpu.dma_semaphore, #tpu.memory_space<semaphore_mem>>) src(%20 : memref<2x32xf32, #tpu.memory_space<any>>) dst(%21 : memref<2x32xf32, #tpu.memory_space<any>>)
    %c2_i32_24 = arith.constant 2 : i32
    %c4_i32_25 = arith.constant 4 : i32
    %c0_i32_26 = arith.constant 0 : i32
    %24 = tpu.memref_slice %arg0[%c4_i32_25, %c0_i32_26] : memref<8x32xf32, #tpu.memory_space<any>> -> memref<2x32xf32, #tpu.memory_space<any>>
    %c4_i32_27 = arith.constant 4 : i32
    %c0_i32_28 = arith.constant 0 : i32
    %25 = tpu.memref_slice %arg1[%c4_i32_27, %c0_i32_28] : memref<8x32xf32, #tpu.memory_space<any>> -> memref<2x32xf32, #tpu.memory_space<any>>
    %26 = tpu.memref_slice %arg2[%c2_i32_24] : memref<4x!tpu.dma_semaphore, #tpu.memory_space<semaphore_mem>> -> memref<1x!tpu.dma_semaphore, #tpu.memory_space<semaphore_mem>>
    %27 = tpu.memref_squeeze %26 : memref<1x!tpu.dma_semaphore, #tpu.memory_space<semaphore_mem>> -> memref<!tpu.dma_semaphore, #tpu.memory_space<semaphore_mem>>
    tpu.wait_dma2 semaphore(%27 : memref<!tpu.dma_semaphore, #tpu.memory_space<semaphore_mem>>) src(%24 : memref<2x32xf32, #tpu.memory_space<any>>) dst(%25 : memref<2x32xf32, #tpu.memory_space<any>>)
    %c3_i32_29 = arith.constant 3 : i32
    %c6_i32_30 = arith.constant 6 : i32
    %c0_i32_31 = arith.constant 0 : i32
    %28 = tpu.memref_slice %arg0[%c6_i32_30, %c0_i32_31] : memref<8x32xf32, #tpu.memory_space<any>> -> memref<2x32xf32, #tpu.memory_space<any>>
    %c6_i32_32 = arith.constant 6 : i32
    %c0_i32_33 = arith.constant 0 : i32
    %29 = tpu.memref_slice %arg1[%c6_i32_32, %c0_i32_33] : memref<8x32xf32, #tpu.memory_space<any>> -> memref<2x32xf32, #tpu.memory_space<any>>
    %30 = tpu.memref_slice %arg2[%c3_i32_29] : memref<4x!tpu.dma_semaphore, #tpu.memory_space<semaphore_mem>> -> memref<1x!tpu.dma_semaphore, #tpu.memory_space<semaphore_mem>>
    %31 = tpu.memref_squeeze %30 : memref<1x!tpu.dma_semaphore, #tpu.memory_space<semaphore_mem>> -> memref<!tpu.dma_semaphore, #tpu.memory_space<semaphore_mem>>
    tpu.wait_dma2 semaphore(%31 : memref<!tpu.dma_semaphore, #tpu.memory_space<semaphore_mem>>) src(%28 : memref<2x32xf32, #tpu.memory_space<any>>) dst(%29 : memref<2x32xf32, #tpu.memory_space<any>>)
    return
  }
}

</mosaic_0001>

<llo_original>
// kernel: materialize_copy.1
$region0: #{materialize_copy.1}
  #allocation0 [shape = 'u32[]', space=smem, size = 0x4, offset = 0x4, fixed_abs, tag = 'smem constant byte address 0x4 - core index']
  #allocation1 [shape = 'u32[144,128]{1,0:T(1,128)}', space=vmem, size = 0x12000, scoped, tag = 'internal scratch']
  #allocation2 [shape = 's32[4]{0}', space=sflag, size = 0x10, scoped, tag = 'scratch operand']
  #allocation3 [shape = 's32[]', space=sflag, size = 0x4, offset = 0, fixed_abs, tag = 'sflag constant byte address 0x0 - dummy sync flag']
  #allocation4 [shape = 'u32[0]{0}', space=smem, size = 0, offset = 0, fixed_abs, tag = 'smem constant byte address 0x0 - null']
  #allocation5 [shape = 's32[]', space=sflag, size = 0x4, offset = 0, fixed_abs, tag = 'sflag constant byte address 0x0 - dummy sync flag']
  #allocation6 [shape = 'u32[0]{0}', space=smem, size = 0, offset = 0, fixed_abs, tag = 'smem constant byte address 0x0 - null']
  #allocation7 [shape = 's32[]', space=sflag, size = 0x4, offset = 0, fixed_abs, tag = 'sflag constant byte address 0x0 - dummy sync flag']
  #allocation8 [shape = 'u32[0]{0}', space=smem, size = 0, offset = 0, fixed_abs, tag = 'smem constant byte address 0x0 - null']
  #allocation9 [shape = 's32[]', space=sflag, size = 0x4, offset = 0, fixed_abs, tag = 'sflag constant byte address 0x0 - dummy sync flag']
  #allocation10 [shape = 'u32[0]{0}', space=smem, size = 0, offset = 0, fixed_abs, tag = 'smem constant byte address 0x0 - null']
  %s0 = inlined_call_operand.hbm [shape: f32[8,32], index: 0, kind: input, shape index: {}]
  %s1 = inlined_call_operand.hbm [shape: f32[8,32], index: 1, kind: output, shape index: {}]
  %s2 = sld [smem:[#allocation0]]
  $region2: #{materialize_copy.1} parent=0
    _
  %s4 = ssub.s32 1, %s2
  %s5 = scalar_select 0, %s4, %s2
  %s7 = sshll.u32 1, 14
  %s8 = sxor.u32 4294967295, %s7
  %s11 = sshll.u32 3, 24
  %s12 = sxor.u32 4294967295, %s11
  %s13 = sand.u32 0, %s12
  %s15 = sor.u32 %s13, 0
  %18 = dma.general %s0, 32, %s1, [#allocation2], [#allocation3], [#allocation4], %s15, 0
  %s19 = scalar_lea.hbm %s0, 32
  %s20 = scalar_lea.hbm %s1, 32
  %s21 = scalar_lea.sflag [#allocation2], 1
  %s23 = sshll.u32 1, 14
  %s24 = sxor.u32 4294967295, %s23
  %s27 = sshll.u32 3, 24
  %s28 = sxor.u32 4294967295, %s27
  %s29 = sand.u32 0, %s28
  %s31 = sor.u32 %s29, 0
  %34 = dma.general %s19, 32, %s20, %s21, [#allocation5], [#allocation6], %s31, 0
  %s35 = scalar_lea.hbm %s0, 64
  %s36 = scalar_lea.hbm %s1, 64
  %s37 = scalar_lea.sflag [#allocation2], 2
  %s39 = sshll.u32 1, 14
  %s40 = sxor.u32 4294967295, %s39
  %s43 = sshll.u32 3, 24
  %s44 = sxor.u32 4294967295, %s43
  %s45 = sand.u32 0, %s44
  %s47 = sor.u32 %s45, 0
  %50 = dma.general %s35, 32, %s36, %s37, [#allocation7], [#allocation8], %s47, 0
  %s51 = scalar_lea.hbm %s0, 96
  %s52 = scalar_lea.hbm %s1, 96
  %s53 = scalar_lea.sflag [#allocation2], 3
  %s55 = sshll.u32 1, 14
  %s56 = sxor.u32 4294967295, %s55
  %s59 = sshll.u32 3, 24
  %s60 = sxor.u32 4294967295, %s59
  %s61 = sand.u32 0, %s60
  %s63 = sor.u32 %s61, 0
  %66 = dma.general %s51, 32, %s52, %s53, [#allocation9], [#allocation10], %s63, 0
  %s67 = smul.u32 2, 1
  %s68 = sshll.u32 %s67, 4
  %69 = dma.done [#allocation2], %s68
  %s70 = sshll.u32 %s67, 4
  %71 = dma.done %s21, %s70
  %s72 = sshll.u32 %s67, 4
  %73 = dma.done %s37, %s72
  %s74 = sshll.u32 %s67, 4
  %75 = dma.done %s53, %s74
  %76 = vsyncmov [#allocation2]
  %s77 = vpop.sfrf %76
  %p78 = scmp.eq.s32.totalorder %s77, 0
  %p79 = pneg %p78
  %81 = shalt.err (%p79)
  %s82 = scalar_lea.sflag [#allocation2], 1
  %83 = vsyncmov %s82
  %s84 = vpop.sfrf %83
  %p85 = scmp.eq.s32.totalorder %s84, 0
  %p86 = pneg %p85
  %88 = shalt.err (%p86)
  %s89 = scalar_lea.sflag [#allocation2], 2
  %90 = vsyncmov %s89
  %s91 = vpop.sfrf %90
  %p92 = scmp.eq.s32.totalorder %s91, 0
  %p93 = pneg %p92
  %95 = shalt.err (%p93)
  %s96 = scalar_lea.sflag [#allocation2], 3
  %97 = vsyncmov %s96
  %s98 = vpop.sfrf %97
  %p99 = scmp.eq.s32.totalorder %s98, 0
  %p100 = pneg %p99
  %102 = shalt.err (%p100)

</llo_original>
